<compile_context>
chip_gen: v5e
topology: v5e:2x2
jax: 0.10.0
libtpu: 0.0.40
codegen_flags: <defaults>
</compile_context>

<pallas_src>
import functools
import math

import jax
import jax.numpy as jnp
from jax.experimental import pallas as pl
from jax.experimental.pallas import tpu as pltpu


# ---------------------------------------------------------------------------
# Hardware probing (defensive: every query has a safe fallback).
# ---------------------------------------------------------------------------
def _tpu_hw():
    vmem_phys = 64 << 20          # conservative default (v7x has the smallest VMEM)
    try:
        info = pltpu.get_tpu_info()
        cap = getattr(info, "vmem_capacity_bytes", None)
        if cap:
            cap = int(cap)
            if cap >= (16 << 20):
                vmem_phys = cap
    except Exception:
        pass
    two_tc = False
    try:
        kind = jax.devices()[0].device_kind.lower()
        # v4 / v7x expose two TensorCores per chip (megacore); v5e/v6e have one.
        two_tc = ("v4" in kind) or ("v7" in kind)
    except Exception:
        pass
    return vmem_phys, two_tc


# ---------------------------------------------------------------------------
# Kernels
# ---------------------------------------------------------------------------
def _stats_kernel(x_ref, sum_ref, sq_ref, acc_sum, acc_sq, *,
                  tile, tps, rows_valid, needs_mask):
    """Per-split partial sum / sum-of-squares over row tiles."""
    i = pl.program_id(1)

    @pl.when(i == 0)
    def _init():
        acc_sum[...] = jnp.zeros_like(acc_sum)
        acc_sq[...] = jnp.zeros_like(acc_sq)

    def _accum(xf):
        if tile % 8 == 0:
            # Keep 8 sublanes live; cross-sublane collapse only once at the end.
            xg = xf.reshape(tile // 8, 8, xf.shape[-1])
            acc_sum[...] += jnp.sum(xg, axis=0)
            acc_sq[...] += jnp.sum(xg * xg, axis=0)
        else:
            acc_sum[0:1, :] += jnp.sum(xf, axis=0, keepdims=True)
            acc_sq[0:1, :] += jnp.sum(xf * xf, axis=0, keepdims=True)

    x = x_ref[...].astype(jnp.float32)
    if needs_mask:
        # Only tiles that straddle (or lie past) the valid-row boundary pay
        # the iota+compare+select cost; full tiles accumulate unmasked.
        base = (pl.program_id(0) * tps + i) * tile
        is_tail = base + tile > rows_valid

        @pl.when(jnp.logical_not(is_tail))
        def _full():
            _accum(x)

        @pl.when(is_tail)
        def _tail():
            row = jax.lax.broadcasted_iota(jnp.int32, (tile, 1), 0) + base
            _accum(jnp.where(row < rows_valid, x, 0.0))
    else:
        _accum(x)

    @pl.when(i == tps - 1)
    def _fin():
        sum_ref[0] = jnp.sum(acc_sum[...], axis=0, keepdims=True)
        sq_ref[0] = jnp.sum(acc_sq[...], axis=0, keepdims=True)


def _apply_kernel(x_ref, scale_ref, shift_ref, o_ref):
    """y = x * scale + shift with per-lane (precomputed) scale/shift."""
    x = x_ref[...].astype(jnp.float32)
    o_ref[...] = (x * scale_ref[...] + shift_ref[...]).astype(o_ref.dtype)


def _fused_kernel(x_ref, gamma_ref, beta_ref, o_ref, *, k, h, count, eps):
    """Whole-array-resident BN: stats + normalize in one pass."""
    x = x_ref[...].astype(jnp.float32)
    s = jnp.sum(x, axis=0, keepdims=True)          # (1, kH)
    sq = jnp.sum(x * x, axis=0, keepdims=True)
    # Fold the k lane-copies of each channel (k is a power of two): a
    # log2(k)-step butterfly of lane rotations leaves every copy's lane
    # holding the full per-channel total.
    sh = (k // 2) * h
    while sh >= h:
        s = s + pltpu.roll(s, sh, axis=1)
        sq = sq + pltpu.roll(sq, sh, axis=1)
        sh //= 2
    inv_n = 1.0 / count
    mean = s * inv_n
    var = jnp.maximum(sq * inv_n - mean * mean, 0.0)
    scale = gamma_ref[...] * jax.lax.rsqrt(var + eps)
    shift = beta_ref[...] - mean * scale
    o_ref[...] = (x * scale + shift).astype(o_ref.dtype)


# ---------------------------------------------------------------------------
# Wrapper
# ---------------------------------------------------------------------------
def edge_bn(e, gamma, beta, *, eps=1e-5,
            stats_block_bytes=None, apply_block_bytes=None, allow_fused=True):
    """Pallas implementation of EdgeBN.forward.

    e:     (B, N, N, H) edge features
    gamma: (H,) BN weight, beta: (H,) BN bias
    track_running_stats=False => always use batch statistics.
    """
    B, N1, N2, H = e.shape
    if N1 == 1:                      # matches `if len(e[0]) == 1: return e`
        return e

    rows = B * N1 * N2
    itemsize = jnp.dtype(e.dtype).itemsize

    vmem_phys, two_tc = _tpu_hw()
    vmem_budget = min(48 << 20, (vmem_phys * 3) // 4)
    if stats_block_bytes is None:
        stats_block_bytes = vmem_budget // 3   # stats double-buffers 1 stream
    if apply_block_bytes is None:
        apply_block_bytes = vmem_budget // 6   # apply double-buffers in + out

    # Lane packing: fold k row-groups into the lane axis so kH is a multiple
    # of 128 (lane-dense loads/stores).  k = 128/gcd(H,128) is a power of two.
    k = 1
    if H % 128 != 0:
        k0 = 128 // math.gcd(H, 128)
        if rows % k0 == 0:
            k = k0
    # TODO(synk): when rows % k0 != 0 a padded + lane-masked packing would
    # still give lane-dense stores; we fall back to k=1 instead of paying an
    # extra whole-array pad copy in HBM.
    kH = k * H
    rows_p = rows // k
    x = e.reshape(rows_p, kH)        # pure row-major reshape, no data movement
    row_bytes = kH * itemsize

    gamma32 = gamma.astype(jnp.float32)
    beta32 = beta.astype(jnp.float32)
    count = float(rows)

    # ---- fused single-pass path: whole packed array resident in VMEM ------
    x_f32_bytes = rows_p * kH * 4
    if allow_fused and 4 * x_f32_bytes + (2 << 20) <= vmem_budget:
        gamma_p = jnp.tile(gamma32, k).reshape(1, kH)
        beta_p = jnp.tile(beta32, k).reshape(1, kH)
        fused_vmem = int(min(vmem_budget, 5 * x_f32_bytes + (4 << 20)))
        y = pl.pallas_call(
            functools.partial(_fused_kernel, k=k, h=H, count=count, eps=eps),
            out_shape=jax.ShapeDtypeStruct((rows_p, kH), e.dtype),
            compiler_params=pltpu.CompilerParams(vmem_limit_bytes=fused_vmem),
        )(x, gamma_p, beta_p)
        return y.reshape(B, N1, N2, H)

    def pick_tile(block_bytes):
        t = max(8, (int(block_bytes) // row_bytes) // 8 * 8)
        return rows_p if rows_p <= t else t

    # ---- pass 1: per-lane partial sums / sums of squares -------------------
    stats_tile = pick_tile(stats_block_bytes)
    nblocks_s = pl.cdiv(rows_p, stats_tile)
    # Split the reduction across both TensorCores only on 2-TC chips.
    nsplit = 2 if (two_tc and nblocks_s >= 2) else 1
    if nsplit == 2 and nblocks_s % 2 == 1:
        # Balance the two cores by re-tiling to an even block count instead of
        # clamping a duplicated (fully masked, wasted) block onto one core.
        t = -(-rows_p // (nblocks_s + 1))
        t = max(8, -(-t // 8) * 8)
        if t < rows_p and pl.cdiv(rows_p, t) % 2 == 0:
            stats_tile = t
            nblocks_s = pl.cdiv(rows_p, stats_tile)
    tps = pl.cdiv(nblocks_s, nsplit)              # row-tiles per split
    needs_mask = (nsplit * tps * stats_tile) != rows_p

    if nsplit * tps == nblocks_s:
        x_stats_map = lambda s, i: (s * tps + i, 0)
    else:
        # Clamp duplicated trailing steps onto the last valid block; their
        # contribution is fully masked to zero inside the kernel.
        x_stats_map = lambda s, i: (jnp.minimum(s * tps + i, nblocks_s - 1), 0)

    stats_vmem = int(min(vmem_budget, 2 * stats_tile * row_bytes + (4 << 20)))

    sums, sqs = pl.pallas_call(
        functools.partial(_stats_kernel, tile=stats_tile, tps=tps,
                          rows_valid=rows_p, needs_mask=needs_mask),
        out_shape=(jax.ShapeDtypeStruct((nsplit, 1, kH), jnp.float32),
                   jax.ShapeDtypeStruct((nsplit, 1, kH), jnp.float32)),
        grid=(nsplit, tps),
        in_specs=[pl.BlockSpec((stats_tile, kH), x_stats_map)],
        out_specs=(pl.BlockSpec((1, 1, kH), lambda s, i: (s, 0, 0)),
                   pl.BlockSpec((1, 1, kH), lambda s, i: (s, 0, 0))),
        scratch_shapes=[pltpu.VMEM((8, kH), jnp.float32),
                        pltpu.VMEM((8, kH), jnp.float32)],
        compiler_params=pltpu.CompilerParams(
            dimension_semantics=("parallel", "arbitrary"),
            vmem_limit_bytes=stats_vmem),
    )(x)

    # Fold the k lane-copies and the per-split partial rows; precompute the
    # per-channel scale/shift once so the apply kernel is a single FMA.
    ch_sum = sums.reshape(nsplit * k, H).sum(axis=0)
    ch_sq = sqs.reshape(nsplit * k, H).sum(axis=0)
    mean = ch_sum / count
    # TODO(synk): E[x^2] - mean^2 can cancel for |mean| >> std; a centered
    # second-moment pass would be needed for such inputs (clamped at 0 here).
    var = jnp.maximum(ch_sq / count - mean * mean, 0.0)
    scale = gamma32 * jax.lax.rsqrt(var + eps)
    shift = beta32 - mean * scale
    scale_p = jnp.tile(scale, k).reshape(1, kH)
    shift_p = jnp.tile(shift, k).reshape(1, kH)

    # ---- pass 2: normalize + affine, tiled over rows ------------------------
    apply_tile = pick_tile(apply_block_bytes)
    nblocks_a = pl.cdiv(rows_p, apply_tile)
    apply_vmem = int(min(vmem_budget, 4 * apply_tile * row_bytes + (4 << 20)))

    y = pl.pallas_call(
        _apply_kernel,
        out_shape=jax.ShapeDtypeStruct((rows_p, kH), e.dtype),
        grid=(nblocks_a,),
        in_specs=[pl.BlockSpec((apply_tile, kH), lambda i: (i, 0)),
                  pl.BlockSpec((1, kH), lambda i: (0, 0)),
                  pl.BlockSpec((1, kH), lambda i: (0, 0))],
        out_specs=pl.BlockSpec((apply_tile, kH), lambda i: (i, 0)),
        compiler_params=pltpu.CompilerParams(
            dimension_semantics=("parallel",),
            vmem_limit_bytes=apply_vmem),
    )(x, scale_p, shift_p)

    return y.reshape(B, N1, N2, H)


def _reference_edge_bn(e, gamma, beta, eps=1e-5):
    """Pure-JAX reference (PyTorch BatchNorm2d with batch stats, channel-last)."""
    if e.shape[1] == 1:
        return e
    x = e.astype(jnp.float32)
    mean = jnp.mean(x, axis=(0, 1, 2), keepdims=True)
    var = jnp.mean((x - mean) ** 2, axis=(0, 1, 2), keepdims=True)
    y = (x - mean) / jnp.sqrt(var + eps) * gamma + beta
    return y.astype(e.dtype)


if __name__ == "__main__":
    key = jax.random.PRNGKey(0)
    k_e, k_g, k_b = jax.random.split(key, 3)

    B, N, H = 2, 8, 32                      # e: (batch, nodes, nodes, hidden_dim)
    e = jax.random.normal(k_e, (B, N, N, H), dtype=jnp.float32)
    gamma = 1.0 + 0.1 * jax.random.normal(k_g, (H,), dtype=jnp.float32)
    beta = 0.1 * jax.random.normal(k_b, (H,), dtype=jnp.float32)
    ref = _reference_edge_bn(e, gamma, beta)

    # 1) Fused single-pass path (lane packed: H=32 -> k=4, kH=128).
    out = jax.block_until_ready(edge_bn(e, gamma, beta))
    assert out.shape == e.shape and out.dtype == e.dtype
    assert jnp.allclose(out, ref, atol=1e-4, rtol=1e-4), "mismatch (fused path)"

    # 2) Two-pass path, single large tile.
    out2 = jax.block_until_ready(edge_bn(e, gamma, beta, allow_fused=False))
    assert jnp.allclose(out2, ref, atol=1e-4, rtol=1e-4), "mismatch (two-pass)"

    # 3) Two-pass, multi-tile (tiny forced blocks -> split stats / pipelined apply).
    out3 = jax.block_until_ready(
        edge_bn(e, gamma, beta, allow_fused=False,
                stats_block_bytes=4096, apply_block_bytes=4096))
    assert jnp.allclose(out3, ref, atol=1e-4, rtol=1e-4), "mismatch (multi-tile)"

    # 4) Masked tail / k=1 path (rows not divisible by the packing factor).
    e4 = jax.random.normal(k_e, (1, 9, 9, H), dtype=jnp.float32)
    ref4 = _reference_edge_bn(e4, gamma, beta)
    out4 = jax.block_until_ready(
        edge_bn(e4, gamma, beta, allow_fused=False,
                stats_block_bytes=2048, apply_block_bytes=2048))
    assert jnp.allclose(out4, ref4, atol=1e-4, rtol=1e-4), "mismatch (masked tail)"
    out4f = jax.block_until_ready(edge_bn(e4, gamma, beta))        # fused, k=1
    assert jnp.allclose(out4f, ref4, atol=1e-4, rtol=1e-4), "mismatch (fused k=1)"

    # 5) Generalized lane packing (H=48 -> k=8, kH=384), two-pass, multi-tile.
    H5 = 48
    g5 = 1.0 + 0.1 * jax.random.normal(k_g, (H5,), dtype=jnp.float32)
    b5 = 0.1 * jax.random.normal(k_b, (H5,), dtype=jnp.float32)
    e5 = jax.random.normal(k_e, (2, 8, 8, H5), dtype=jnp.float32)
    ref5 = _reference_edge_bn(e5, g5, b5)
    out5 = jax.block_until_ready(
        edge_bn(e5, g5, b5, allow_fused=False,
                stats_block_bytes=8192, apply_block_bytes=8192))
    assert jnp.allclose(out5, ref5, atol=1e-4, rtol=1e-4), "mismatch (H=48 packing)"

    # 6) N == 1 early-return branch (static shape check, no kernel launch).
    e1 = jax.random.normal(k_e, (B, 1, 1, H), dtype=jnp.float32)
    assert jnp.array_equal(edge_bn(e1, gamma, beta), e1)

    print("KERNEL_OK")
</pallas_src>

<mosaic_0001>
module attributes {stable_mosaic.version = 11 : i64} {
  func.func @_fused_kernel(%arg0: memref<32x128xf32, #tpu.memory_space<vmem>>, %arg1: memref<1x128xf32, #tpu.memory_space<vmem>>, %arg2: memref<1x128xf32, #tpu.memory_space<vmem>>, %arg3: memref<32x128xf32, #tpu.memory_space<vmem>>) attributes {dimension_semantics = [], scalar_prefetch = 0 : i64, scratch_operands = 0 : i64, tpu.core_type = #tpu.core_type<tc>} {
    %c0 = arith.constant 0 : index
    %c0_0 = arith.constant 0 : index
    %0 = vector.load %arg0[%c0, %c0_0] : memref<32x128xf32, #tpu.memory_space<vmem>>, vector<32x128xf32>
    %cst = arith.constant dense<0.000000e+00> : vector<128xf32>
    %1 = vector.multi_reduction <add>, %0, %cst [0] : vector<32x128xf32> to vector<128xf32>
    %2 = vector.shape_cast %1 : vector<128xf32> to vector<1x128xf32>
    %3 = arith.mulf %0, %0 : vector<32x128xf32>
    %cst_1 = arith.constant dense<0.000000e+00> : vector<128xf32>
    %4 = vector.multi_reduction <add>, %3, %cst_1 [0] : vector<32x128xf32> to vector<128xf32>
    %5 = vector.shape_cast %4 : vector<128xf32> to vector<1x128xf32>
    %c64_i32 = arith.constant 64 : i32
    %6 = tpu.dynamic_rotate %2 by %c64_i32 dim 1 : vector<1x128xf32>, i32 -> vector<1x128xf32>
    %7 = arith.addf %2, %6 : vector<1x128xf32>
    %c64_i32_2 = arith.constant 64 : i32
    %8 = tpu.dynamic_rotate %5 by %c64_i32_2 dim 1 : vector<1x128xf32>, i32 -> vector<1x128xf32>
    %9 = arith.addf %5, %8 : vector<1x128xf32>
    %c32_i32 = arith.constant 32 : i32
    %10 = tpu.dynamic_rotate %7 by %c32_i32 dim 1 : vector<1x128xf32>, i32 -> vector<1x128xf32>
    %11 = arith.addf %7, %10 : vector<1x128xf32>
    %c32_i32_3 = arith.constant 32 : i32
    %12 = tpu.dynamic_rotate %9 by %c32_i32_3 dim 1 : vector<1x128xf32>, i32 -> vector<1x128xf32>
    %13 = arith.addf %9, %12 : vector<1x128xf32>
    %cst_4 = arith.constant 7.812500e-03 : f32
    %14 = vector.broadcast %cst_4 : f32 to vector<1x128xf32>
    %15 = arith.mulf %11, %14 : vector<1x128xf32>
    %cst_5 = arith.constant 7.812500e-03 : f32
    %16 = vector.broadcast %cst_5 : f32 to vector<1x128xf32>
    %17 = arith.mulf %13, %16 : vector<1x128xf32>
    %18 = arith.mulf %15, %15 : vector<1x128xf32>
    %19 = arith.subf %17, %18 : vector<1x128xf32>
    %cst_6 = arith.constant 0.000000e+00 : f32
    %20 = vector.broadcast %cst_6 : f32 to vector<1x128xf32>
    %21 = arith.maximumf %19, %20 : vector<1x128xf32>
    %c0_7 = arith.constant 0 : index
    %c0_8 = arith.constant 0 : index
    %22 = vector.load %arg1[%c0_7, %c0_8] : memref<1x128xf32, #tpu.memory_space<vmem>>, vector<1x128xf32>
    %cst_9 = arith.constant 9.99999974E-6 : f32
    %23 = vector.broadcast %cst_9 : f32 to vector<1x128xf32>
    %24 = arith.addf %21, %23 : vector<1x128xf32>
    %25 = math.rsqrt %24 : vector<1x128xf32>
    %26 = arith.mulf %22, %25 : vector<1x128xf32>
    %c0_10 = arith.constant 0 : index
    %c0_11 = arith.constant 0 : index
    %27 = vector.load %arg2[%c0_10, %c0_11] : memref<1x128xf32, #tpu.memory_space<vmem>>, vector<1x128xf32>
    %28 = arith.mulf %15, %26 : vector<1x128xf32>
    %29 = arith.subf %27, %28 : vector<1x128xf32>
    %30 = vector.broadcast %26 : vector<1x128xf32> to vector<32x128xf32>
    %31 = arith.mulf %0, %30 : vector<32x128xf32>
    %32 = vector.broadcast %29 : vector<1x128xf32> to vector<32x128xf32>
    %33 = arith.addf %31, %32 : vector<32x128xf32>
    %c0_12 = arith.constant 0 : index
    %c0_13 = arith.constant 0 : index
    %34 = vector.load %arg3[%c0_12, %c0_13] : memref<32x128xf32, #tpu.memory_space<vmem>>, vector<32x128xf32>
    tpu.vector_store %arg3[%c0_12, %c0_13], %33 {strides = array<i32>} : memref<32x128xf32, #tpu.memory_space<vmem>>, vector<32x128xf32>,
    return
  }
}

</mosaic_0001>

<llo_original>
// kernel: tpu_custom_call.1
$region0: #{tpu_custom_call.1}
  #allocation0 [shape = 'u32[]', space=smem, size = 0x4, offset = 0x4, fixed_abs, tag = 'smem constant byte address 0x4 - core index']
  #allocation1 [shape = 'u32[72,128]{1,0:T(1,128)}', space=vmem, size = 0x9000, scoped, tag = 'internal scratch']
  %s0 = inlined_call_operand.hbm [shape: f32[32,128], index: 0, kind: input, shape index: {}]
  %s1 = inlined_call_operand.hbm [shape: f32[1,128], index: 1, kind: input, shape index: {}]
  %s2 = inlined_call_operand.vmem [shape: f32[1,128], index: 2, kind: input, shape index: {}]
  %s3 = inlined_call_operand.hbm [shape: f32[32,128], index: 3, kind: output, shape index: {}]
  %s4 = sld [smem:[#allocation0]]
  $region30: #{tpu_custom_call.1} parent=0
    _
  %s6 = ssub.s32 1, %s4
  %s7 = scalar_select 0, %s6, %s4
  $region1: #{tpu_custom_call.1} parent=0
    #allocation2 [shape = 'u8[16384]{0}', space=vmem, size = 0x4000, scoped, tag = 'input window, operand 0, single buffered']
    #allocation3 [shape = 's32[1]{0}', space=sflag, size = 0x4, scoped, tag = 'scoped memory for tpu_custom_call.1']
    #allocation4 [shape = 's32[1]{0}', space=sflag, size = 0x4, scoped, tag = 'scoped memory for tpu_custom_call.1']
    #allocation5 [shape = 'u8[512]{0}', space=vmem, size = 0x400, scoped, tag = 'input window, operand 1, single buffered']
    #allocation6 [shape = 's32[1]{0}', space=sflag, size = 0x4, scoped, tag = 'scoped memory for tpu_custom_call.1']
    #allocation7 [shape = 'u8[16384]{0}', space=vmem, size = 0x4000, scoped, tag = 'output window, operand 0, single buffered']
    %8 = vsyncpa [#allocation3], 0
    %9 = vsyncpa [#allocation6], 0
    %10 = vsyncpa [#allocation4], 0
    // Predicated region
    $region2: #{tpu_custom_call.1} parent=1 // pred_check
      _
    $region3: #{tpu_custom_call.1} parent=1 // pred_check_branch
      %12 = sbr.rel (0) target = $region5
    $region4: #{tpu_custom_call.1} parent=1 // pred_region
      %14 = vsyncadd [#allocation3], 0
      %s15 = sshll.u32 %s0, 4
      %s16 = int_to_ptr.hbm [resolvable:$true] %s15
      %s17 = sshll.u32 [#allocation2], 4
      %s18 = int_to_ptr.vmem [resolvable:$true] %s17
      %23 = dma.hbm_to_vmem [thread:$0]  %s16, 512, %s18, [#allocation3], 128, 128, 8
    $region5: #{tpu_custom_call.1} parent=1 // pred_fallthru
      _
    // Predicated region
    $region6: #{tpu_custom_call.1} parent=1 // pred_check
      _
    $region7: #{tpu_custom_call.1} parent=1 // pred_check_branch
      %25 = sbr.rel (0) target = $region9
    $region8: #{tpu_custom_call.1} parent=1 // pred_region
      %27 = vsyncadd [#allocation6], 0
      %s29 = sshll.u32 %s1, 4
      %s30 = int_to_ptr.hbm [resolvable:$true] %s29
      %s31 = sshll.u32 [#allocation5], 4
      %s32 = int_to_ptr.vmem [resolvable:$true] %s31
      %34 = dma.hbm_to_vmem [thread:$0]  %s30, 16, %s32, [#allocation6]
    $region9: #{tpu_custom_call.1} parent=1 // pred_fallthru
      _
    // Predicated region
    $region10: #{tpu_custom_call.1} parent=1 // pred_check
      _
    $region11: #{tpu_custom_call.1} parent=1 // pred_check_branch
      %36 = sbr.rel (0) target = $region13
    $region12: #{tpu_custom_call.1} parent=1 // pred_region
      _
    $region13: #{tpu_custom_call.1} parent=1 // pred_fallthru
      _
    // Predicated region
    $region14: #{tpu_custom_call.1} parent=1 // pred_check
      _
    $region15: #{tpu_custom_call.1} parent=1 // pred_check_branch
      %38 = sbr.rel (0) target = $region17
    $region16: #{tpu_custom_call.1} parent=1 // pred_region
      %40 = dma.done [#allocation3], 512
    $region17: #{tpu_custom_call.1} parent=1 // pred_fallthru
      _
    // Predicated region
    $region18: #{tpu_custom_call.1} parent=1 // pred_check
      _
    $region19: #{tpu_custom_call.1} parent=1 // pred_check_branch
      %42 = sbr.rel (0) target = $region21
    $region20: #{tpu_custom_call.1} parent=1 // pred_region
      %44 = dma.done [#allocation6], 16
    $region21: #{tpu_custom_call.1} parent=1 // pred_fallthru
      _
    %v45 = vld [vmem:[#allocation2] sm:$0xff]
    %v46 = vld [vmem:[#allocation2 + $0x8] sm:$0xff]
    %v47 = vld [vmem:[#allocation2 + $0x10] sm:$0xff]
    %v48 = vld [vmem:[#allocation2 + $0x18] sm:$0xff]
    %v49 = vadd.f32 %v45, %v46
    %v50 = vadd.f32 %v49, %v47
    %v51 = vadd.f32 %v50, %v48
    %v52 = vrot.slane %v51, 4
    %v53 = vadd.f32 %v51, %v52
    %v54 = vrot.slane %v53, 2
    %v55 = vadd.f32 %v53, %v54
    %v56 = vrot.slane %v55, 1
    %v57 = vadd.f32 %v55, %v56
    %v58 = vmul.f32 %v45, %v45
    %v59 = vmul.f32 %v46, %v46
    %v60 = vmul.f32 %v47, %v47
    %v61 = vmul.f32 %v48, %v48
    %v62 = vadd.f32 %v58, %v59
    %v63 = vadd.f32 %v62, %v60
    %v64 = vadd.f32 %v63, %v61
    %v65 = vrot.slane %v64, 4
    %v66 = vadd.f32 %v64, %v65
    %v67 = vrot.slane %v66, 2
    %v68 = vadd.f32 %v66, %v67
    %v69 = vrot.slane %v68, 1
    %v70 = vadd.f32 %v68, %v69
    %71 = vrot.lane.b32.xlu0 %v57, 64
    %v72 = vpop.permute.xlu0 %71
    %v73 = vadd.f32 %v57, %v72
    %74 = vrot.lane.b32.xlu0 %v70, 64
    %v75 = vpop.permute.xlu0 %74
    %v76 = vadd.f32 %v70, %v75
    %77 = vrot.lane.b32.xlu0 %v73, 32
    %v78 = vpop.permute.xlu0 %77
    %v79 = vadd.f32 %v73, %v78
    %80 = vrot.lane.b32.xlu0 %v76, 32
    %v81 = vpop.permute.xlu0 %80
    %v82 = vadd.f32 %v76, %v81
    %v83 = vmul.f32 %v79, 0.0078125
    %v84 = vmul.f32 %v82, 0.0078125
    %v85 = vmul.f32 %v83, %v83
    %v86 = vsub.f32 %v84, %v85
    %v87 = vmax.f32 %v86, 0.0
    %v88 = vld [vmem:[#allocation5] sm:$0x1]
    %v89 = vadd.f32 %v87, 1e-05
    %v90 = vrsqrt.pop %v89
    %v91 = vmul.f32 %v90, %v89
    %v92 = vmul.f32 %v91, %v90
    %v93 = vmul.f32 0.5, %v92
    %v94 = vsub.f32 1.5, %v93
    %v95 = vmul.f32 %v90, %v94
    %vm96 = vweird.f32 %v89
    %vm97 = vweird.f32 %v90
    %vm98 = vmor %vm96, %vm97
    %v99 = vsel %vm98, %v90, %v95
    %v100 = vmul.f32 %v88, %v99
    %v101 = vld [vmem:[%s2] sm:$0x1]
    %v102 = vmul.f32 %v83, %v100
    %v103 = vsub.f32 %v101, %v102
    %v105 = vperm.slane %v100, 0
    %v107 = vmul.f32 %v45, %v105
    %v108 = vmul.f32 %v46, %v105
    %v109 = vmul.f32 %v47, %v105
    %v110 = vmul.f32 %v48, %v105
    %v112 = vperm.slane %v103, 0
    %v114 = vadd.f32 %v107, %v112
    %v115 = vadd.f32 %v108, %v112
    %v116 = vadd.f32 %v109, %v112
    %v117 = vadd.f32 %v110, %v112
    %118 = vst [vmem:[#allocation7] sm:$0xff] %v114
    %119 = vst [vmem:[#allocation7 + $0x8] sm:$0xff] %v115
    %120 = vst [vmem:[#allocation7 + $0x10] sm:$0xff] %v116
    %121 = vst [vmem:[#allocation7 + $0x18] sm:$0xff] %v117
    // Predicated region
    $region22: #{tpu_custom_call.1} parent=1 // pred_check
      _
    $region23: #{tpu_custom_call.1} parent=1 // pred_check_branch
      %123 = sbr.rel (0) target = $region25
    $region24: #{tpu_custom_call.1} parent=1 // pred_region
      %125 = vsyncadd [#allocation4], 0
      %s126 = sshll.u32 [#allocation7], 4
      %s127 = int_to_ptr.vmem [resolvable:$true] %s126
      %s128 = sshll.u32 %s3, 4
      %s129 = int_to_ptr.hbm [resolvable:$true] %s128
      %134 = dma.vmem_to_hbm [thread:$0]  %s127, 512, %s129, [#allocation4], 128, 128, 8
    $region25: #{tpu_custom_call.1} parent=1 // pred_fallthru
      _
    // Predicated region
    $region26: #{tpu_custom_call.1} parent=1 // pred_check
      _
    $region27: #{tpu_custom_call.1} parent=1 // pred_check_branch
      %136 = sbr.rel (0) target = $region29
    $region28: #{tpu_custom_call.1} parent=1 // pred_region
      %138 = dma.done [#allocation4], 512
    $region29: #{tpu_custom_call.1} parent=1 // pred_fallthru
      _
    %139 = vsyncpa [#allocation3], 1
    %140 = vsyncpa [#allocation6], 1
    %141 = vsyncpa [#allocation4], 1

</llo_original>
